<compile_context>
chip_gen: v7x
topology: tpu7x:2x2x1
jax: 0.10.0
libtpu: 0.0.40
codegen_flags: <defaults>
</compile_context>

<pallas_src>
import functools

import jax
import jax.numpy as jnp
from jax.experimental import pallas as pl
from jax.experimental.pallas import tpu as pltpu


def linear_seft_kernel(x_ref, m_ref, wh_t_ref, bh_ref, wg_t_ref, o_ref, *, flat):
    """One batch tile.

    flat=True : x_ref is (TN*T, F), m_ref is (TN*T, 1)   (T % 8 == 0)
    flat=False: x_ref is (TN, T, F), m_ref is (TN, T)    (fallback path)
    m_ref     : pre-scaled mask  (onehot / forced-pos0 count), f32
    wh_t_ref  : (F, F)   Wh^T   (bf16)
    bh_ref    : (1, F)   bias, f32
    wg_t_ref  : (F, F)   Wg^T   (bf16)
    o_ref     : (TN, F)  f32
    """
    tn, f = o_ref.shape

    if flat:
        t = m_ref.shape[0] // tn
        # One tall-skinny MXU matmul for the whole batch tile; f32 accumulation.
        h = jnp.dot(x_ref[...], wh_t_ref[...], preferred_element_type=jnp.float32)
        h = jnp.maximum(h + bh_ref[...], 0.0)          # bias + ReLU in f32
        # seq_avg_pooling with a pre-scaled mask: one lane-broadcast multiply
        # zeroes invalid timesteps and applies the 1/count scaling.
        h = h * m_ref[...]                              # (TN*T, F)
        # (TN*T, F) -> (TN, T, F): T is a multiple of 8, so this split lands on
        # sublane-tile boundaries (layout no-op for f32); reduce over T.
        pooled = jnp.sum(h.reshape(tn, t, f), axis=1)   # (TN, F) f32
    else:
        # Fallback when T is not sublane-aligned: batched matmul.
        h = jnp.einsum('ntf,fg->ntg', x_ref[...], wh_t_ref[...],
                       preferred_element_type=jnp.float32)
        h = jnp.maximum(h + bh_ref[...], 0.0)
        pooled = jnp.sum(h * m_ref[...][:, :, None], axis=1)

    # g(pooled) = pooled @ Wg^T  (bias=False), MXU with f32 accumulation.
    o_ref[...] = jnp.dot(pooled.astype(wg_t_ref.dtype), wg_t_ref[...],
                         preferred_element_type=jnp.float32)


def _default_block_n(n, t, f):
    """Largest multiple-of-8 batch tile that evenly divides N while keeping a
    few MiB of per-step VMEM traffic (double-buffered bf16 x tiles + f32 mask +
    f32 relu temp), well under the default scoped-VMEM limit on all generations
    (including v7x's 64 MiB physical VMEM)."""
    if n <= 8:
        return n
    per_row = 2 * (t * f * 2) + 2 * (t * 4) + t * f * 4 + 2 * f * 4
    cap = max(8, (4 << 20) // max(per_row, 1))
    best = 0
    for cand in range(8, min(n, cap) + 1, 8):
        if n % cand == 0:
            best = cand
    return best if best else n


def linear_seft(x, onehot, wh, bh, wg, *, block_n=None, mxu_dtype=jnp.bfloat16):
    """x: (N, T, F) f32, onehot: (N, T) bool, wh/wg: (F, F) [out, in], bh: (F,)."""
    n, t, f = x.shape

    # --- wrapper-side prep (cheap XLA ops / layout plumbing) ------------------
    # Pre-scaled pooling mask: numerator uses onehot, denominator uses onehot
    # with position 0 forced True (matches seq_avg_pooling exactly).
    new_onehot = onehot.at[:, 0].set(True)
    count = new_onehot.sum(axis=1, keepdims=True).astype(jnp.float32)   # (N,1) >= 1
    mscaled = onehot.astype(jnp.float32) / count                        # (N, T)

    wh_t = wh.T.astype(mxu_dtype)                 # (F, F) == Wh^T
    wg_t = wg.T.astype(mxu_dtype)                 # (F, F) == Wg^T
    bh2 = bh.reshape(1, f).astype(jnp.float32)

    # --- batch tiling ---------------------------------------------------------
    tn = block_n if block_n is not None else _default_block_n(n, t, f)
    assert n % tn == 0, f"block_n={tn} must evenly divide N={n}"
    assert tn == n or tn % 8 == 0, "batch tile must be a multiple of 8 (or full N)"
    grid = (n // tn,)

    flat = (t % 8 == 0)   # flatten only when T is sublane-aligned
    if flat:
        x_in = x.reshape(n * t, f).astype(mxu_dtype)
        m_in = mscaled.reshape(n * t, 1)
        x_spec = pl.BlockSpec((tn * t, f), lambda i: (i, 0))
        m_spec = pl.BlockSpec((tn * t, 1), lambda i: (i, 0))
    else:
        x_in = x.astype(mxu_dtype)
        m_in = mscaled
        x_spec = pl.BlockSpec((tn, t, f), lambda i: (i, 0, 0))
        m_spec = pl.BlockSpec((tn, t), lambda i: (i, 0))

    kernel = functools.partial(linear_seft_kernel, flat=flat)

    bytes_accessed = (x_in.size * x_in.dtype.itemsize + m_in.size * 4
                      + 2 * f * f * 2 + f * 4 + n * f * 4)
    cost = pl.CostEstimate(flops=2 * n * t * f * f + 2 * n * f * f,
                           transcendentals=0,
                           bytes_accessed=bytes_accessed)

    return pl.pallas_call(
        kernel,
        out_shape=jax.ShapeDtypeStruct((n, f), jnp.float32),
        grid=grid,
        in_specs=[
            x_spec,                                          # x (tiled over N)
            m_spec,                                          # pre-scaled mask
            pl.BlockSpec((f, f), lambda i: (0, 0)),          # Wh^T (resident)
            pl.BlockSpec((1, f), lambda i: (0, 0)),          # bias (resident)
            pl.BlockSpec((f, f), lambda i: (0, 0)),          # Wg^T (resident)
        ],
        out_specs=pl.BlockSpec((tn, f), lambda i: (i, 0)),
        compiler_params=pltpu.CompilerParams(
            dimension_semantics=("parallel",)),              # 2 TCs on v7x
        cost_estimate=cost,
    )(x_in, m_in, wh_t, bh2, wg_t)


def linear_seft_ref(x, onehot, wh, bh, wg):
    """Pure-JAX f32 reference mirroring the PyTorch module."""
    hx = jnp.maximum(jnp.einsum('ntf,gf->ntg', x, wh) + bh, 0.0)
    hx = jnp.where(onehot[:, :, None], hx, 0.0)
    new_onehot = onehot.at[:, 0].set(True)
    pooled = hx.sum(axis=1) / new_onehot.sum(axis=1, keepdims=True)
    return pooled @ wg.T


if __name__ == "__main__":
    N, T, F = 32, 8, 32   # batch, seq, feature (input_dims); gives a 4-step grid

    key = jax.random.PRNGKey(0)
    kx, km, kwh, kbh, kwg = jax.random.split(key, 5)

    x = jax.random.normal(kx, (N, T, F), dtype=jnp.float32)
    onehot = jax.random.uniform(km, (N, T)) < 0.6
    onehot = onehot.at[0].set(False)      # exercise the all-False / forced-pos0 path

    # LinearSEFT.reset(): h = Linear(F, F, bias=True), g = Linear(F, F, bias=False);
    # in_dropout / out_dropout default to 0.0 -> identity in eval; activation='linear'.
    wh = jax.random.normal(kwh, (F, F), dtype=jnp.float32) * 0.1
    bh = jax.random.normal(kbh, (F,), dtype=jnp.float32) * 0.1
    wg = jax.random.normal(kwg, (F, F), dtype=jnp.float32) * 0.1

    out = jax.block_until_ready(linear_seft(x, onehot, wh, bh, wg, block_n=8))
    ref = linear_seft_ref(x, onehot, wh, bh, wg)

    assert out.shape == (N, F)
    # bf16 MXU operands (f32 accumulation) -> relaxed tolerance vs the f32 reference.
    max_err = jnp.max(jnp.abs(out - ref))
    assert jnp.allclose(out, ref, atol=3e-2, rtol=3e-2), f"max abs err {max_err}"
    print("KERNEL_OK")
</pallas_src>

<mosaic_0001>
module attributes {stable_mosaic.version = 11 : i64} {
  func.func @linear_seft_kernel(%arg0: i32, %arg1: memref<64x32xbf16, #tpu.memory_space<vmem>>, %arg2: memref<64x1xf32, #tpu.memory_space<vmem>>, %arg3: memref<32x32xbf16, #tpu.memory_space<vmem>>, %arg4: memref<1x32xf32, #tpu.memory_space<vmem>>, %arg5: memref<32x32xbf16, #tpu.memory_space<vmem>>, %arg6: memref<8x32xf32, #tpu.memory_space<vmem>>) attributes {dimension_semantics = [#tpu.dimension_semantics<parallel>], iteration_bounds = array<i64: 4>, scalar_prefetch = 0 : i64, scratch_operands = 0 : i64, tpu.core_type = #tpu.core_type<tc>, window_params = [{transform_indices = @transform_0, window_bounds = array<i64: 64, 32>}, {transform_indices = @transform_1, window_bounds = array<i64: 64, 1>}, {pipeline_mode = #tpu.pipeline_mode<synchronous>, transform_indices = @transform_2, window_bounds = array<i64: 32, 32>}, {pipeline_mode = #tpu.pipeline_mode<synchronous>, transform_indices = @transform_3, window_bounds = array<i64: 1, 32>}, {pipeline_mode = #tpu.pipeline_mode<synchronous>, transform_indices = @transform_4, window_bounds = array<i64: 32, 32>}, {transform_indices = @transform_5, window_bounds = array<i64: 8, 32>}]} {
    %c0 = arith.constant 0 : index
    %c0_0 = arith.constant 0 : index
    %0 = vector.load %arg1[%c0, %c0_0] : memref<64x32xbf16, #tpu.memory_space<vmem>>, vector<64x32xbf16>
    %c0_1 = arith.constant 0 : index
    %c0_2 = arith.constant 0 : index
    %1 = vector.load %arg3[%c0_1, %c0_2] : memref<32x32xbf16, #tpu.memory_space<vmem>>, vector<32x32xbf16>
    %cst = arith.constant dense<0.000000e+00> : vector<64x32xf32>
    %2 = tpu.matmul %0, %1, %cst {dimension_numbers = #tpu.dot_dimension_numbers<[1], [0], [0], [1], [0, 0, 1, 1], [], []>} : vector<64x32xbf16>, vector<32x32xbf16>, vector<64x32xf32> -> vector<64x32xf32>
    %c0_3 = arith.constant 0 : index
    %c0_4 = arith.constant 0 : index
    %3 = vector.load %arg4[%c0_3, %c0_4] : memref<1x32xf32, #tpu.memory_space<vmem>>, vector<1x32xf32>
    %4 = vector.broadcast %3 : vector<1x32xf32> to vector<64x32xf32>
    %5 = arith.addf %2, %4 : vector<64x32xf32>
    %cst_5 = arith.constant 0.000000e+00 : f32
    %6 = vector.broadcast %cst_5 : f32 to vector<64x32xf32>
    %7 = arith.maximumf %5, %6 : vector<64x32xf32>
    %c0_6 = arith.constant 0 : index
    %c0_7 = arith.constant 0 : index
    %8 = vector.load %arg2[%c0_6, %c0_7] : memref<64x1xf32, #tpu.memory_space<vmem>>, vector<64x1xf32>
    %9 = vector.broadcast %8 : vector<64x1xf32> to vector<64x32xf32>
    %10 = arith.mulf %7, %9 : vector<64x32xf32>
    %11 = vector.shape_cast %10 : vector<64x32xf32> to vector<8x8x32xf32>
    %cst_8 = arith.constant dense<0.000000e+00> : vector<8x32xf32>
    %12 = vector.multi_reduction <add>, %11, %cst_8 [1] : vector<8x8x32xf32> to vector<8x32xf32>
    %13 = arith.truncf %12 : vector<8x32xf32> to vector<8x32xbf16>
    %c0_9 = arith.constant 0 : index
    %c0_10 = arith.constant 0 : index
    %14 = vector.load %arg5[%c0_9, %c0_10] : memref<32x32xbf16, #tpu.memory_space<vmem>>, vector<32x32xbf16>
    %cst_11 = arith.constant dense<0.000000e+00> : vector<8x32xf32>
    %15 = tpu.matmul %13, %14, %cst_11 {dimension_numbers = #tpu.dot_dimension_numbers<[1], [0], [0], [1], [0, 0, 1, 1], [], []>} : vector<8x32xbf16>, vector<32x32xbf16>, vector<8x32xf32> -> vector<8x32xf32>
    %c0_12 = arith.constant 0 : index
    %c0_13 = arith.constant 0 : index
    %16 = vector.load %arg6[%c0_12, %c0_13] : memref<8x32xf32, #tpu.memory_space<vmem>>, vector<8x32xf32>
    tpu.vector_store %arg6[%c0_12, %c0_13], %15 {strides = array<i32>} : memref<8x32xf32, #tpu.memory_space<vmem>>, vector<8x32xf32>,
    return
  }
  func.func @transform_0(%arg0: i32) -> (i32, i32) {
    %c0_i32 = arith.constant 0 : i32
    %c0_i32_0 = arith.constant 0 : i32
    return %arg0, %c0_i32 : i32, i32
  }
  func.func @transform_1(%arg0: i32) -> (i32, i32) {
    %c0_i32 = arith.constant 0 : i32
    %c0_i32_0 = arith.constant 0 : i32
    return %arg0, %c0_i32 : i32, i32
  }
  func.func @transform_2(%arg0: i32) -> (i32, i32) {
    %c0_i32 = arith.constant 0 : i32
    %c0_i32_0 = arith.constant 0 : i32
    %c0_i32_1 = arith.constant 0 : i32
    return %c0_i32, %c0_i32_0 : i32, i32
  }
  func.func @transform_3(%arg0: i32) -> (i32, i32) {
    %c0_i32 = arith.constant 0 : i32
    %c0_i32_0 = arith.constant 0 : i32
    %c0_i32_1 = arith.constant 0 : i32
    return %c0_i32, %c0_i32_0 : i32, i32
  }
  func.func @transform_4(%arg0: i32) -> (i32, i32) {
    %c0_i32 = arith.constant 0 : i32
    %c0_i32_0 = arith.constant 0 : i32
    %c0_i32_1 = arith.constant 0 : i32
    return %c0_i32, %c0_i32_0 : i32, i32
  }
  func.func @transform_5(%arg0: i32) -> (i32, i32) {
    %c0_i32 = arith.constant 0 : i32
    %c0_i32_0 = arith.constant 0 : i32
    return %arg0, %c0_i32 : i32, i32
  }
}

</mosaic_0001>

<llo_original>
// kernel: tpu_custom_call.1
$region0: #{tpu_custom_call.1}
  #allocation0 [shape = 'u32[]', space=smem, size = 0x4, offset = 0x4, fixed_abs, tag = 'smem constant byte address 0x4 - core index']
  #allocation1 [shape = 'u32[144,128]{1,0:T(1,128)}', space=vmem, size = 0x12000, scoped, tag = 'internal scratch']
  %s0 = inlined_call_operand.vmem [shape: bf16[256,32], index: 0, kind: input, shape index: {}]
  %s1 = inlined_call_operand.vmem [shape: f32[256,1], index: 1, kind: input, shape index: {}]
  %s2 = inlined_call_operand.vmem [shape: bf16[32,32], index: 2, kind: input, shape index: {}]
  %s3 = inlined_call_operand.vmem [shape: f32[1,32], index: 3, kind: input, shape index: {}]
  %s4 = inlined_call_operand.vmem [shape: bf16[32,32], index: 4, kind: input, shape index: {}]
  %s5 = inlined_call_operand.hbm [shape: f32[32,32], index: 5, kind: output, shape index: {}]
  %s6 = sld [smem:[#allocation0]]
  $region53: #{tpu_custom_call.1} parent=0
    _
  %s8 = ssub.s32 1, %s6
  %s9 = scalar_select 0, %s8, %s6
  $region1: #{tpu_custom_call.1} parent=0
    #allocation2 [shape = 'u8[8192]{0}', space=vmem, size = 0x2000, scoped, tag = 'output window, operand 0']
    #allocation3 [shape = 's32[2]{0}', space=sflag, size = 0x8, scoped, tag = 'scoped memory for tpu_custom_call.1']
    %10 = vsyncpa [#allocation3], 0
    %s11 = scalar_lea.sflag [#allocation3], 1
    %12 = vsyncpa %s11, 0
    loop: start=0, step=1, limit=6
    $region2: #{tpu_custom_call.1} parent=1 // loop_pre_header
      _
    $region3: #{tpu_custom_call.1} parent=1 // loop_header
      %s14 = sphi 0, %s18
      %p15 = scmp.ge.s32.totalorder %s14, 6
      %s24 = sphi 0, %s26
      %s27 = sphi 0, %s24
      %s28 = sphi 0, %s27
      %s44 = sphi 0, %s28
      %s50 = sphi 0, %s52
      %s53 = sphi 0, %s50
      %s54 = sphi 0, %s53
      %s70 = sphi 0, %s54
      %s74 = sphi 0, %s74
      %s76 = sphi 0, %s74
      %s77 = sphi 0, %s76
      %s91 = sphi 0, %s77
      %s95 = sphi 0, %s95
      %s97 = sphi 0, %s95
      %s98 = sphi 0, %s97
      %s112 = sphi 0, %s98
      %s116 = sphi 0, %s116
      %s118 = sphi 0, %s116
      %s119 = sphi 0, %s118
      %s133 = sphi 0, %s119
      %s139 = sphi 0, %s141
      %s142 = sphi 0, %s139
      %s143 = sphi 0, %s142
      %s159 = sphi 0, %s143
    $region4: #{tpu_custom_call.1} parent=1 // loop_header_branch
      %17 = sbr.rel (%p15) target = $region8
    $region5: #{tpu_custom_call.1} parent=1 // loop_body
      %s19 = ssub.s32 %s14, 1
      %s20 = ssub.s32 %s14, 2
      %s21 = sadd.s32 %s14, 1
      %s22 = ssub.s32 %s14, %s21
      %p23 = scmp.eq.s32.totalorder %s22, 0
      %s25 = sadd.s32 %s24, 1
      %s26 = scalar_select %p23, %s24, %s25
      %p29 = pneg %p23
      %p30 = scmp.eq.s32.totalorder %s14, 3
      %p31 = por %p29, %p30
      %p32 = scmp.ne.s32.totalorder %s24, %s27
      %p33 = scmp.eq.s32.totalorder %s14, 0
      %p34 = por %p32, %p33
      %p35 = scmp.ne.s32.totalorder %s24, %s27
      %p36 = scmp.eq.s32.totalorder %s19, 3
      %p37 = por %p35, %p36
      %p38 = scmp.ne.s32.totalorder %s27, %s28
      %p39 = scmp.eq.s32.totalorder %s19, 0
      %p40 = por %p38, %p39
      %p41 = scmp.ne.s32.totalorder %s27, %s28
      %p42 = scmp.eq.s32.totalorder %s20, 3
      %p43 = por %p41, %p42
      %p45 = scmp.ne.s32.totalorder %s28, %s44
      %p46 = scmp.eq.s32.totalorder %s20, 0
      %p47 = por %p45, %p46
      %s48 = ssub.s32 %s14, %s21
      %p49 = scmp.eq.s32.totalorder %s48, 0
      %s51 = sadd.s32 %s50, 1
      %s52 = scalar_select %p49, %s50, %s51
      %p55 = pneg %p49
      %p56 = scmp.eq.s32.totalorder %s14, 3
      %p57 = por %p55, %p56
      %p58 = scmp.ne.s32.totalorder %s50, %s53
      %p59 = scmp.eq.s32.totalorder %s14, 0
      %p60 = por %p58, %p59
      %p61 = scmp.ne.s32.totalorder %s50, %s53
      %p62 = scmp.eq.s32.totalorder %s19, 3
      %p63 = por %p61, %p62
      %p64 = scmp.ne.s32.totalorder %s53, %s54
      %p65 = scmp.eq.s32.totalorder %s19, 0
      %p66 = por %p64, %p65
      %p67 = scmp.ne.s32.totalorder %s53, %s54
      %p68 = scmp.eq.s32.totalorder %s20, 3
      %p69 = por %p67, %p68
      %p71 = scmp.ne.s32.totalorder %s54, %s70
      %p72 = scmp.eq.s32.totalorder %s20, 0
      %p73 = por %p71, %p72
      %s75 = sadd.s32 %s74, 1
      %p78 = scmp.eq.s32.totalorder %s14, 3
      %p79 = scmp.ne.s32.totalorder %s74, %s76
      %p80 = scmp.eq.s32.totalorder %s14, 0
      %p81 = por %p79, %p80
      %p82 = scmp.ne.s32.totalorder %s74, %s76
      %p83 = scmp.eq.s32.totalorder %s19, 3
      %p84 = por %p82, %p83
      %p85 = scmp.ne.s32.totalorder %s76, %s77
      %p86 = scmp.eq.s32.totalorder %s19, 0
      %p87 = por %p85, %p86
      %p88 = scmp.ne.s32.totalorder %s76, %s77
      %p89 = scmp.eq.s32.totalorder %s20, 3
      %p90 = por %p88, %p89
      %p92 = scmp.ne.s32.totalorder %s77, %s91
      %p93 = scmp.eq.s32.totalorder %s20, 0
      %p94 = por %p92, %p93
      %s96 = sadd.s32 %s95, 1
      %p99 = scmp.eq.s32.totalorder %s14, 3
      %p100 = scmp.ne.s32.totalorder %s95, %s97
      %p101 = scmp.eq.s32.totalorder %s14, 0
      %p102 = por %p100, %p101
      %p103 = scmp.ne.s32.totalorder %s95, %s97
      %p104 = scmp.eq.s32.totalorder %s19, 3
      %p105 = por %p103, %p104
      %p106 = scmp.ne.s32.totalorder %s97, %s98
      %p107 = scmp.eq.s32.totalorder %s19, 0
      %p108 = por %p106, %p107
      %p109 = scmp.ne.s32.totalorder %s97, %s98
      %p110 = scmp.eq.s32.totalorder %s20, 3
      %p111 = por %p109, %p110
      %p113 = scmp.ne.s32.totalorder %s98, %s112
      %p114 = scmp.eq.s32.totalorder %s20, 0
      %p115 = por %p113, %p114
      %s117 = sadd.s32 %s116, 1
      %p120 = scmp.eq.s32.totalorder %s14, 3
      %p121 = scmp.ne.s32.totalorder %s116, %s118
      %p122 = scmp.eq.s32.totalorder %s14, 0
      %p123 = por %p121, %p122
      %p124 = scmp.ne.s32.totalorder %s116, %s118
      %p125 = scmp.eq.s32.totalorder %s19, 3
      %p126 = por %p124, %p125
      %p127 = scmp.ne.s32.totalorder %s118, %s119
      %p128 = scmp.eq.s32.totalorder %s19, 0
      %p129 = por %p127, %p128
      %p130 = scmp.ne.s32.totalorder %s118, %s119
      %p131 = scmp.eq.s32.totalorder %s20, 3
      %p132 = por %p130, %p131
      %p134 = scmp.ne.s32.totalorder %s119, %s133
      %p135 = scmp.eq.s32.totalorder %s20, 0
      %p136 = por %p134, %p135
      %s137 = ssub.s32 %s14, %s21
      %p138 = scmp.eq.s32.totalorder %s137, 0
      %s140 = sadd.s32 %s139, 1
      %s141 = scalar_select %p138, %s139, %s140
      %p144 = pneg %p138
      %p145 = scmp.eq.s32.totalorder %s14, 3
      %p146 = por %p144, %p145
      %p147 = scmp.ne.s32.totalorder %s139, %s142
      %p148 = scmp.eq.s32.totalorder %s14, 0
      %p149 = por %p147, %p148
      %p150 = scmp.ne.s32.totalorder %s139, %s142
      %p151 = scmp.eq.s32.totalorder %s19, 3
      %p152 = por %p150, %p151
      %p153 = scmp.ne.s32.totalorder %s142, %s143
      %p154 = scmp.eq.s32.totalorder %s19, 0
      %p155 = por %p153, %p154
      %p156 = scmp.ne.s32.totalorder %s142, %s143
      %p157 = scmp.eq.s32.totalorder %s20, 3
      %p158 = por %p156, %p157
      %p160 = scmp.ne.s32.totalorder %s143, %s159
      %p161 = scmp.eq.s32.totalorder %s20, 0
      %p162 = por %p160, %p161
      %p163 = scmp.le.s32.totalorder 1, %s14
      %p164 = scmp.lt.s32.totalorder %s14, 5
      %p165 = pnand %p163, %p164
      %p166 = pneg %p165
      // Predicated region
      $region9: #{tpu_custom_call.1} parent=5 // pred_check
        _
      $region10: #{tpu_custom_call.1} parent=5 // pred_check_branch
        %168 = sbr.rel (%p165) target = $region12
      $region11: #{tpu_custom_call.1} parent=5 // pred_region
        %s169 = ssub.s32 %s14, 1
        // Predicated region
        $region13: #{tpu_custom_call.1} parent=11 // pred_check
          %p170 = pneg %p87
        $region14: #{tpu_custom_call.1} parent=11 // pred_check_branch
          %172 = sbr.rel (%p170) target = $region16
        $region15: #{tpu_custom_call.1} parent=11 // pred_region
          _
        $region16: #{tpu_custom_call.1} parent=11 // pred_fallthru
          _
        // Predicated region
        $region17: #{tpu_custom_call.1} parent=11 // pred_check
          %p173 = pneg %p108
        $region18: #{tpu_custom_call.1} parent=11 // pred_check_branch
          %175 = sbr.rel (%p173) target = $region20
        $region19: #{tpu_custom_call.1} parent=11 // pred_region
          _
        $region20: #{tpu_custom_call.1} parent=11 // pred_fallthru
          _
        // Predicated region
        $region21: #{tpu_custom_call.1} parent=11 // pred_check
          %p176 = pneg %p129
        $region22: #{tpu_custom_call.1} parent=11 // pred_check_branch
          %178 = sbr.rel (%p176) target = $region24
        $region23: #{tpu_custom_call.1} parent=11 // pred_region
          _
        $region24: #{tpu_custom_call.1} parent=11 // pred_fallthru
          _
      $region12: #{tpu_custom_call.1} parent=5 // pred_fallthru
        _
      %p179 = scmp.lt.s32.totalorder %s14, 4
      // Predicated region
      $region25: #{tpu_custom_call.1} parent=5 // pred_check
        %p180 = pneg %p179
      $region26: #{tpu_custom_call.1} parent=5 // pred_check_branch
        %182 = sbr.rel (%p180) target = $region28
      $region27: #{tpu_custom_call.1} parent=5 // pred_region
        // Predicated region
        $region29: #{tpu_custom_call.1} parent=27 // pred_check
          %p183 = pneg %p34
        $region30: #{tpu_custom_call.1} parent=27 // pred_check_branch
          %185 = sbr.rel (%p183) target = $region32
        $region31: #{tpu_custom_call.1} parent=27 // pred_region
          %s186 = smul.u32 8, %s14
          %p187 = scmp.lt.s32.totalorder %s186, 31
          %s188 = scalar_select %p187, %s186, 31
          %s189 = smul.addr %s188, 4
          %s190 = scalar_lea.vmem %s0, %s189
          %s191 = smul.u32 8, %s14
        $region32: #{tpu_custom_call.1} parent=27 // pred_fallthru
          _
        // Predicated region
        $region33: #{tpu_custom_call.1} parent=27 // pred_check
          %p192 = pneg %p60
        $region34: #{tpu_custom_call.1} parent=27 // pred_check_branch
          %194 = sbr.rel (%p192) target = $region36
        $region35: #{tpu_custom_call.1} parent=27 // pred_region
          %s195 = smul.u32 8, %s14
          %p196 = scmp.lt.s32.totalorder %s195, 31
          %s197 = scalar_select %p196, %s195, 31
          %s198 = smul.addr %s197, 8
          %s199 = scalar_lea.vmem %s1, %s198
          %s200 = smul.u32 8, %s14
        $region36: #{tpu_custom_call.1} parent=27 // pred_fallthru
          _
      $region28: #{tpu_custom_call.1} parent=5 // pred_fallthru
        _
      %p201 = scmp.le.s32.totalorder 1, %s14
      %p202 = scmp.lt.s32.totalorder %s14, 5
      %p203 = pnand %p201, %p202
      %p204 = pneg %p203
      // Predicated region
      $region37: #{tpu_custom_call.1} parent=5 // pred_check
        _
      $region38: #{tpu_custom_call.1} parent=5 // pred_check_branch
        %206 = sbr.rel (%p203) target = $region40
      $region39: #{tpu_custom_call.1} parent=5 // pred_region
        %s207 = ssub.s32 %s14, 1
        %s208 = smul.u32 8, %s19
        %p209 = scmp.lt.s32.totalorder %s208, 31
        %s210 = scalar_select %p209, %s208, 31
        %s211 = smul.addr %s210, 4
        %s212 = scalar_lea.vmem %s0, %s211
        %p213 = pneg %p40
        %p214 = pneg %p37
        %s215 = smul.u32 8, %s19
        %p216 = scmp.lt.s32.totalorder %s215, 31
        %s217 = scalar_select %p216, %s215, 31
        %s218 = smul.addr %s217, 8
        %s219 = scalar_lea.vmem %s1, %s218
        %p220 = pneg %p66
        %p221 = pneg %p63
        %p222 = pneg %p87
        %p223 = pneg %p84
        %p224 = pneg %p108
        %p225 = pneg %p105
        %p226 = pneg %p129
        %p227 = pneg %p126
        %p228 = pneg %p155
        %p229 = pneg %p152
        %s230 = sand.u32 %s142, 1
        %s231 = scalar_lea.sflag [#allocation3], %s230
        %s232 = sand.u32 %s142, 1
        %s233 = smul.addr %s232, 8
        %s234 = scalar_lea.vmem [#allocation2], %s233
        %s235 = smul.u32 8, %s19
        %p236 = scmp.lt.s32.totalorder %s235, 31
        %s237 = scalar_select %p236, %s235, 31
        %s238 = smul.addr %s237, 4
        %s239 = scalar_lea.vmem %s0, %s238
        %s240 = smul.u32 8, %s19
        %s241 = smul.u32 8, %s19
        %p242 = scmp.lt.s32.totalorder %s241, 31
        %s243 = scalar_select %p242, %s241, 31
        %s244 = smul.addr %s243, 8
        %s245 = scalar_lea.vmem %s1, %s244
        %s246 = smul.u32 8, %s19
        %v248 = vld [vmem:[%s239] sm:$0xf]
        %v249 = vld [vmem:[%s239 + $0x4] sm:$0xf]
        %v250 = vld [vmem:[%s239 + $0x8] sm:$0xf]
        %v251 = vld [vmem:[%s239 + $0xc] sm:$0xf]
        %v252 = vld [vmem:[%s239 + $0x10] sm:$0xf]
        %v253 = vld [vmem:[%s239 + $0x14] sm:$0xf]
        %v254 = vld [vmem:[%s239 + $0x18] sm:$0xf]
        %v255 = vld [vmem:[%s239 + $0x1c] sm:$0xf]
        %v256 = vld [vmem:[%s2] sm:$0xf]
        %v257 = vld [vmem:[%s2 + $0x4] sm:$0xf]
        %v258 = vld [vmem:[%s2 + $0x8] sm:$0xf]
        %v259 = vld [vmem:[%s2 + $0xc] sm:$0xf]
        %v260 = vld [vmem:[%s3] sm:$0x1]
        %v262 = vlaneseq
        %v263 = vshrl.u32 %v262, 7
        %v264 = vsub.s32 0, %v263
        %v265 = vrot.slane %v260, %v264
        %v275 = vunpack.c.l.b16 %v248
        %v276 = vunpack.c.l.b16 %v249
        %v277 = vunpack.c.l.b16 %v250
        %v278 = vunpack.c.l.b16 %v251
        %v279 = vunpack.c.l.b16 %v252
        %v280 = vunpack.c.l.b16 %v253
        %v281 = vunpack.c.l.b16 %v254
        %v282 = vunpack.c.l.b16 %v255
        %v283 = vpack.c.b16 %v276, %v275
        %v284 = vpack.c.b16 %v278, %v277
        %v285 = vpack.c.b16 %v280, %v279
        %v286 = vpack.c.b16 %v282, %v281
        %v291 = vunpack.c.l.b16 %v256
        %v292 = vunpack.c.l.b16 %v257
        %v293 = vunpack.c.l.b16 %v258
        %v294 = vunpack.c.l.b16 %v259
        %v295 = vpack.c.b16 %v292, %v291
        %v296 = vpack.c.b16 %v294, %v293
        %vm299 = vcmask 261120
        %v301 = vsel %vm299, %v283, 0
        %v304 = vsel %vm299, %v284, 0
        %v307 = vsel %vm299, %v285, 0
        %v310 = vsel %vm299, %v286, 0
        %312 = vmatprep.subr.bf16.mxu0 0
        %313 = vmatpush1.bf16.msra.mxu0 %v295
        %314 = vmatprep.subr.bf16.mxu0 0
        %315 = vmatpush1.bf16.msra.mxu0 %v296
        %316 = vmatprep.subr.bf16.mxu0 0
        %317 = vmatpush1.bf16.msra.mxu0 0
        %318 = vmatprep.subr.bf16.mxu0 0
        %319 = vmatpush1.bf16.msra.mxu0 0
        %320 = vmatprep.subr.bf16.mxu0 0
        %321 = vmatpush1.bf16.msra.mxu0 0
        %322 = vmatprep.subr.bf16.mxu0 0
        %323 = vmatpush1.bf16.msra.mxu0 0
        %324 = vmatprep.subr.bf16.mxu0 0
        %325 = vmatpush1.bf16.msra.mxu0 0
        %326 = vmatprep.subr.bf16.mxu0 0
        %327 = vmatpush1.bf16.msra.mxu0 0
        %328 = vmatprep.subr.bf16.mxu0 0
        %329 = vmatpush1.bf16.msra.mxu0 0
        %330 = vmatprep.subr.bf16.mxu0 0
        %331 = vmatpush1.bf16.msra.mxu0 0
        %332 = vmatprep.subr.bf16.mxu0 0
        %333 = vmatpush1.bf16.msra.mxu0 0
        %334 = vmatprep.subr.bf16.mxu0 0
        %335 = vmatpush1.bf16.msra.mxu0 0
        %336 = vmatprep.subr.bf16.mxu0 0
        %337 = vmatpush1.bf16.msra.mxu0 0
        %338 = vmatprep.subr.bf16.mxu0 0
        %339 = vmatpush1.bf16.msra.mxu0 0
        %340 = vmatprep.subr.bf16.mxu0 0
        %341 = vmatpush1.bf16.msra.mxu0 0
        %342 = vmatprep.subr.bf16.mxu0 0
        %343 = vmatpush1.bf16.msra.mxu0 0
        %344 = vmatprep.mubr.bf16.mxu0 0
        %345 = vmatmul.mubr.bf16.gmra.mrb[0].mxu0 %v301
        %v346 = vpop.f32.mrb[0].mxu0
        %v347 = vadd.f32 %v265, %v346
        %v348 = vpop.f32.mrb[0].mxu0
        %v349 = vpop.f32.mrb[0].mxu0
        %v350 = vadd.f32 %v265, %v349
        %v351 = vpop.f32.mrb[0].mxu0
        %352 = vmatprep.mubr.bf16.mxu0 0
        %353 = vmatmul.mubr.bf16.gmra.mrb[0].mxu0 %v304
        %v354 = vpop.f32.mrb[0].mxu0
        %v355 = vadd.f32 %v265, %v354
        %v356 = vpop.f32.mrb[0].mxu0
        %v357 = vpop.f32.mrb[0].mxu0
        %v358 = vadd.f32 %v265, %v357
        %v359 = vpop.f32.mrb[0].mxu0
        %360 = vmatprep.mubr.bf16.mxu0 0
        %361 = vmatmul.mubr.bf16.gmra.mrb[0].mxu0 %v307
        %v362 = vpop.f32.mrb[0].mxu0
        %v363 = vadd.f32 %v265, %v362
        %v364 = vpop.f32.mrb[0].mxu0
        %v365 = vpop.f32.mrb[0].mxu0
        %v366 = vadd.f32 %v265, %v365
        %v367 = vpop.f32.mrb[0].mxu0
        %368 = vmatprep.mubr.bf16.mxu0 0
        %369 = vmatmul.mubr.bf16.gmra.mrb[0].mxu0 %v310
        %v370 = vpop.f32.mrb[0].mxu0
        %v371 = vadd.f32 %v265, %v370
        %v372 = vpop.f32.mrb[0].mxu0
        %v373 = vpop.f32.mrb[0].mxu0
        %v374 = vadd.f32 %v265, %v373
        %v375 = vpop.f32.mrb[0].mxu0
        %376 = vdwg.mxu0
        %v377 = vmax.f32 %v347, 0.0
        %v378 = vmax.f32 %v350, 0.0
        %v379 = vmax.f32 %v355, 0.0
        %v380 = vmax.f32 %v358, 0.0
        %v381 = vmax.f32 %v363, 0.0
        %v382 = vmax.f32 %v366, 0.0
        %v383 = vmax.f32 %v371, 0.0
        %v384 = vmax.f32 %v374, 0.0
        %v385 = vld [vmem:[%s245] sm:$0xff]
        %v386 = vld [vmem:[%s245 + $0x8] sm:$0xff]
        %v387 = vld [vmem:[%s245 + $0x10] sm:$0xff]
        %v388 = vld [vmem:[%s245 + $0x18] sm:$0xff]
        %v389 = vld [vmem:[%s245 + $0x20] sm:$0xff]
        %v390 = vld [vmem:[%s245 + $0x28] sm:$0xff]
        %v391 = vld [vmem:[%s245 + $0x30] sm:$0xff]
        %v392 = vld [vmem:[%s245 + $0x38] sm:$0xff]
        %394 = vset.pattern.permute.xlu0 0
        %395 = vperm.xlu0 %394, %v385
        %v396 = vpop.permute.xlu0 %395
        %399 = vset.pattern.permute.xlu0 0
        %400 = vperm.xlu0 %399, %v386
        %v401 = vpop.permute.xlu0 %400
        %404 = vset.pattern.permute.xlu0 0
        %405 = vperm.xlu0 %404, %v387
        %v406 = vpop.permute.xlu0 %405
        %409 = vset.pattern.permute.xlu0 0
        %410 = vperm.xlu0 %409, %v388
        %v411 = vpop.permute.xlu0 %410
        %414 = vset.pattern.permute.xlu0 0
        %415 = vperm.xlu0 %414, %v389
        %v416 = vpop.permute.xlu0 %415
        %419 = vset.pattern.permute.xlu0 0
        %420 = vperm.xlu0 %419, %v390
        %v421 = vpop.permute.xlu0 %420
        %424 = vset.pattern.permute.xlu0 0
        %425 = vperm.xlu0 %424, %v391
        %v426 = vpop.permute.xlu0 %425
        %429 = vset.pattern.permute.xlu0 0
        %430 = vperm.xlu0 %429, %v392
        %v431 = vpop.permute.xlu0 %430
        %v433 = vmul.f32 %v377, %v396
        %v434 = vmul.f32 %v378, %v401
        %v435 = vmul.f32 %v379, %v406
        %v436 = vmul.f32 %v380, %v411
        %v437 = vmul.f32 %v381, %v416
        %v438 = vmul.f32 %v382, %v421
        %v439 = vmul.f32 %v383, %v426
        %v440 = vmul.f32 %v384, %v431
        %v441 = vsel %vm299, %v433, 0.0
        %v442 = vrot.slane %v441, 4
        %v443 = vadd.f32 %v441, %v442
        %v444 = vrot.slane %v443, 2
        %v445 = vadd.f32 %v443, %v444
        %v446 = vrot.slane %v445, 1
        %v447 = vadd.f32 %v445, %v446
        %v448 = vsel %vm299, %v434, 0.0
        %v449 = vrot.slane %v448, 4
        %v450 = vadd.f32 %v448, %v449
        %v451 = vrot.slane %v450, 2
        %v452 = vadd.f32 %v450, %v451
        %v453 = vrot.slane %v452, 1
        %v454 = vadd.f32 %v452, %v453
        %v455 = vsel %vm299, %v435, 0.0
        %v456 = vrot.slane %v455, 4
        %v457 = vadd.f32 %v455, %v456
        %v458 = vrot.slane %v457, 2
        %v459 = vadd.f32 %v457, %v458
        %v460 = vrot.slane %v459, 1
        %v461 = vadd.f32 %v459, %v460
        %v462 = vsel %vm299, %v436, 0.0
        %v463 = vrot.slane %v462, 4
        %v464 = vadd.f32 %v462, %v463
        %v465 = vrot.slane %v464, 2
        %v466 = vadd.f32 %v464, %v465
        %v467 = vrot.slane %v466, 1
        %v468 = vadd.f32 %v466, %v467
        %v469 = vsel %vm299, %v437, 0.0
        %v470 = vrot.slane %v469, 4
        %v471 = vadd.f32 %v469, %v470
        %v472 = vrot.slane %v471, 2
        %v473 = vadd.f32 %v471, %v472
        %v474 = vrot.slane %v473, 1
        %v475 = vadd.f32 %v473, %v474
        %v476 = vsel %vm299, %v438, 0.0
        %v477 = vrot.slane %v476, 4
        %v478 = vadd.f32 %v476, %v477
        %v479 = vrot.slane %v478, 2
        %v480 = vadd.f32 %v478, %v479
        %v481 = vrot.slane %v480, 1
        %v482 = vadd.f32 %v480, %v481
        %v483 = vsel %vm299, %v439, 0.0
        %v484 = vrot.slane %v483, 4
        %v485 = vadd.f32 %v483, %v484
        %v486 = vrot.slane %v485, 2
        %v487 = vadd.f32 %v485, %v486
        %v488 = vrot.slane %v487, 1
        %v489 = vadd.f32 %v487, %v488
        %v490 = vsel %vm299, %v440, 0.0
        %v491 = vrot.slane %v490, 4
        %v492 = vadd.f32 %v490, %v491
        %v493 = vrot.slane %v492, 2
        %v494 = vadd.f32 %v492, %v493
        %v495 = vrot.slane %v494, 1
        %v496 = vadd.f32 %v494, %v495
        %v497 = vpack.c.bf16 %v447, %v447
        %v498 = vpack.c.bf16 %v454, %v454
        %v499 = vpack.c.bf16 %v461, %v461
        %v500 = vpack.c.bf16 %v468, %v468
        %v501 = vpack.c.bf16 %v475, %v475
        %v502 = vpack.c.bf16 %v482, %v482
        %v503 = vpack.c.bf16 %v489, %v489
        %v504 = vpack.c.bf16 %v496, %v496
        %v505 = vld [vmem:[%s4] sm:$0xf]
        %v506 = vld [vmem:[%s4 + $0x4] sm:$0xf]
        %v507 = vld [vmem:[%s4 + $0x8] sm:$0xf]
        %v508 = vld [vmem:[%s4 + $0xc] sm:$0xf]
        %v517 = vunpack.c.l.b16 %v497
        %v518 = vunpack.c.l.b16 %v498
        %v519 = vunpack.c.l.b16 %v499
        %v520 = vunpack.c.l.b16 %v500
        %v521 = vunpack.c.l.b16 %v501
        %v522 = vunpack.c.l.b16 %v502
        %v523 = vunpack.c.l.b16 %v503
        %v524 = vunpack.c.l.b16 %v504
        %vm525 = vcmask 1041409
        %v526 = vsel %vm525, %v518, %v517
        %vm527 = vcmask 1042434
        %v528 = vsel %vm527, %v519, %v526
        %vm529 = vcmask 1043459
        %v530 = vsel %vm529, %v520, %v528
        %vm531 = vcmask 1044484
        %v532 = vsel %vm531, %v521, %v530
        %vm533 = vcmask 1045509
        %v534 = vsel %vm533, %v522, %v532
        %vm535 = vcmask 1046534
        %v536 = vsel %vm535, %v523, %v534
        %vm537 = vcmask 1047559
        %v538 = vsel %vm537, %v524, %v536
        %v539 = vpack.c.b16 %v538, %v538
        %v544 = vunpack.c.l.b16 %v505
        %v545 = vunpack.c.l.b16 %v506
        %v546 = vunpack.c.l.b16 %v507
        %v547 = vunpack.c.l.b16 %v508
        %v548 = vpack.c.b16 %v545, %v544
        %v549 = vpack.c.b16 %v547, %v546
        %v553 = vsel %vm299, %v539, 0
        %555 = vmatprep.subr.bf16.mxu0 0
        %556 = vmatpush1.bf16.msra.mxu0 %v548
        %557 = vmatprep.subr.bf16.mxu0 0
        %558 = vmatpush1.bf16.msra.mxu0 %v549
        %559 = vmatprep.subr.bf16.mxu0 0
        %560 = vmatpush1.bf16.msra.mxu0 0
        %561 = vmatprep.subr.bf16.mxu0 0
        %562 = vmatpush1.bf16.msra.mxu0 0
        %563 = vmatprep.subr.bf16.mxu0 0
        %564 = vmatpush1.bf16.msra.mxu0 0
        %565 = vmatprep.subr.bf16.mxu0 0
        %566 = vmatpush1.bf16.msra.mxu0 0
        %567 = vmatprep.subr.bf16.mxu0 0
        %568 = vmatpush1.bf16.msra.mxu0 0
        %569 = vmatprep.subr.bf16.mxu0 0
        %570 = vmatpush1.bf16.msra.mxu0 0
        %571 = vmatprep.subr.bf16.mxu0 0
        %572 = vmatpush1.bf16.msra.mxu0 0
        %573 = vmatprep.subr.bf16.mxu0 0
        %574 = vmatpush1.bf16.msra.mxu0 0
        %575 = vmatprep.subr.bf16.mxu0 0
        %576 = vmatpush1.bf16.msra.mxu0 0
        %577 = vmatprep.subr.bf16.mxu0 0
        %578 = vmatpush1.bf16.msra.mxu0 0
        %579 = vmatprep.subr.bf16.mxu0 0
        %580 = vmatpush1.bf16.msra.mxu0 0
        %581 = vmatprep.subr.bf16.mxu0 0
        %582 = vmatpush1.bf16.msra.mxu0 0
        %583 = vmatprep.subr.bf16.mxu0 0
        %584 = vmatpush1.bf16.msra.mxu0 0
        %585 = vmatprep.subr.bf16.mxu0 0
        %586 = vmatpush1.bf16.msra.mxu0 0
        %587 = vmatprep.mubr.bf16.mxu0 0
        %588 = vmatmul.mubr.bf16.gmra.mrb[0].mxu0 %v553
        %v589 = vpop.f32.mrb[0].mxu0
        %v590 = vadd.f32 0.0, %v589
        %v591 = vpop.f32.mrb[0].mxu0
        %v592 = vpop.f32.mrb[0].mxu0
        %v593 = vpop.f32.mrb[0].mxu0
        %594 = vdwg.mxu0
        %595 = vst.msk [vmem:[%s234] sm:$0xff] %vm299, %v590
        %s596 = sand.u32 %s142, 1
        %s597 = scalar_lea.sflag [#allocation3], %s596
        %s598 = sand.u32 %s142, 1
        %s599 = smul.addr %s598, 8
        %s600 = scalar_lea.vmem [#allocation2], %s599
        // Predicated region
        $region41: #{tpu_custom_call.1} parent=39 // pred_check
          %p601 = pneg %p152
        $region42: #{tpu_custom_call.1} parent=39 // pred_check_branch
          %603 = sbr.rel (%p601) target = $region44
        $region43: #{tpu_custom_call.1} parent=39 // pred_region
          %s605 = ssub.s32 128, 128
          %606 = vsyncadd %s597, %s605
          %s607 = smul.addr %s19, 128
          %s608 = scalar_lea.hbm %s5, %s607
          %s610 = sshll.u32 %s600, 4
          %s611 = int_to_ptr.vmem [resolvable:$true] %s610
          %613 = dma.vmem_to_hbm [thread:$0]  %s611, 128, %s608, %s597
        $region44: #{tpu_custom_call.1} parent=39 // pred_fallthru
          _
      $region40: #{tpu_custom_call.1} parent=5 // pred_fallthru
        _
      %p614 = scmp.le.s32.totalorder 2, %s14
      // Predicated region
      $region45: #{tpu_custom_call.1} parent=5 // pred_check
        %p615 = pneg %p614
      $region46: #{tpu_custom_call.1} parent=5 // pred_check_branch
        %617 = sbr.rel (%p615) target = $region48
      $region47: #{tpu_custom_call.1} parent=5 // pred_region
        %s618 = ssub.s32 %s14, 2
        // Predicated region
        $region49: #{tpu_custom_call.1} parent=47 // pred_check
          %p619 = pneg %p158
        $region50: #{tpu_custom_call.1} parent=47 // pred_check_branch
          %621 = sbr.rel (%p619) target = $region52
        $region51: #{tpu_custom_call.1} parent=47 // pred_region
          %s622 = sand.u32 %s143, 1
          %s623 = scalar_lea.sflag [#allocation3], %s622
          %s624 = sand.u32 %s143, 1
          %s625 = smul.addr %s624, 8
          %s626 = scalar_lea.vmem [#allocation2], %s625
          %627 = dma.done %s623, 128
        $region52: #{tpu_custom_call.1} parent=47 // pred_fallthru
          _
      $region48: #{tpu_custom_call.1} parent=5 // pred_fallthru
        _
    $region6: #{tpu_custom_call.1} parent=1 // loop_footer
      %s18 = sadd.s32 1, %s14
    $region7: #{tpu_custom_call.1} parent=1 // loop_footer_branch
      %13 = sbr.rel target = $region3
    $region8: #{tpu_custom_call.1} parent=1 // loop_exit
      _
    %628 = vsyncpa [#allocation3], 1
    %s629 = scalar_lea.sflag [#allocation3], 1
    %630 = vsyncpa %s629, 1

</llo_original>
